<compile_context>
chip_gen: v7x
topology: tpu7x:2x2x1
jax: 0.10.0
libtpu: 0.0.40
codegen_flags: <defaults>
</compile_context>

<pallas_src>
import functools

import jax
import jax.numpy as jnp
from jax.experimental import pallas as pl
from jax.experimental.pallas import tpu as pltpu

LANES = 128
SUBLANES = 8
GROUP = SUBLANES * LANES          # 1024 elements = one f32 vreg worth of data
MAX_TILE_G = 512                  # 512 groups -> 2 MiB f32 tile per input
NUM_CORE_SPLIT = 2                # megacore split (v7x); harmless on 1-TC chips


def _masked_mse_kernel(pred_ref, target_ref, sum_ref, cnt_ref, *,
                       tile_g, steps_per_core, num_groups):
    c = pl.program_id(0)          # core-split (parallel) axis
    i = pl.program_id(1)          # sequential row-loop (arbitrary) axis

    @pl.when(i == 0)
    def _():
        sum_ref[...] = jnp.zeros_like(sum_ref)
        cnt_ref[...] = jnp.zeros_like(cnt_ref)

    # Unclamped global group offset of this step.  The index_map clamps the
    # DMA so it never reads past the array; any garbage (padded tail of the
    # last block) or duplicate (clamped) groups are masked out here.
    g_start = (c * steps_per_core + i) * tile_g
    g_ids = g_start + jax.lax.broadcasted_iota(
        jnp.int32, (tile_g, SUBLANES, LANES), 0)
    in_bounds = g_ids < num_groups

    t = target_ref[...]
    p = pred_ref[...]
    valid = jnp.logical_and(t > 0.0, in_bounds)
    diff = jnp.where(valid, t - p, 0.0)

    # Leading-dim reductions are plain vector adds (no XLU); accumulate into
    # the grid-resident (8, 128) output blocks.
    sum_ref[...] += jnp.sum(diff * diff, axis=0)
    cnt_ref[...] += jnp.sum(valid.astype(jnp.float32), axis=0)


def masked_mse_loss(pred, target):
    assert pred.ndim == target.ndim, "inconsistent dimensions"
    pred = pred.astype(jnp.float32)
    target = target.astype(jnp.float32)

    n = pred.size
    num_groups = pl.cdiv(n, GROUP)
    padded_n = num_groups * GROUP

    p_flat = pred.reshape(-1)
    t_flat = target.reshape(-1)
    if padded_n != n:
        # Minimal zero-pad, only when the size is not 1024-aligned.
        # Padded target == 0 is excluded by the (target > 0) mask.
        pad = padded_n - n
        p_flat = jnp.pad(p_flat, (0, pad))
        t_flat = jnp.pad(t_flat, (0, pad))

    p3 = p_flat.reshape(num_groups, SUBLANES, LANES)
    t3 = t_flat.reshape(num_groups, SUBLANES, LANES)

    tile_g = min(MAX_TILE_G, num_groups)
    num_blocks = pl.cdiv(num_groups, tile_g)
    split = min(NUM_CORE_SPLIT, num_blocks)
    steps = pl.cdiv(num_blocks, split)

    def in_map(c, i):
        # Clamp so the DMA stays in-bounds; masked in-kernel via g_ids.
        return (jnp.minimum(c * steps + i, num_blocks - 1), 0, 0)

    out_map = lambda c, i: (c, 0, 0)

    kernel = functools.partial(
        _masked_mse_kernel,
        tile_g=tile_g, steps_per_core=steps, num_groups=num_groups)

    sums, cnts = pl.pallas_call(
        kernel,
        out_shape=(
            jax.ShapeDtypeStruct((split, SUBLANES, LANES), jnp.float32),
            jax.ShapeDtypeStruct((split, SUBLANES, LANES), jnp.float32),
        ),
        grid_spec=pltpu.PrefetchScalarGridSpec(
            num_scalar_prefetch=0,
            grid=(split, steps),
            in_specs=[
                pl.BlockSpec((tile_g, SUBLANES, LANES), in_map),
                pl.BlockSpec((tile_g, SUBLANES, LANES), in_map),
            ],
            out_specs=(
                pl.BlockSpec((None, SUBLANES, LANES), out_map),
                pl.BlockSpec((None, SUBLANES, LANES), out_map),
            ),
        ),
        compiler_params=pltpu.CompilerParams(
            dimension_semantics=("parallel", "arbitrary"),
        ),
    )(p3, t3)

    # Tiny final combine (a few KiB).  Matches torch `.mean()` over the
    # boolean-selected diff; no valid elements -> NaN, same as torch.
    return jnp.sum(sums) / jnp.sum(cnts)


def _reference(pred, target):
    mask = target > 0
    diff = jnp.where(mask, target - pred, 0.0)
    return jnp.sum(diff * diff) / jnp.sum(mask.astype(jnp.float32))


if __name__ == "__main__":
    key = jax.random.PRNGKey(0)
    k1, k2, k3, k4, k5, k6 = jax.random.split(key, 6)

    # Primary small test: NCHW [2, 4, 16, 16] (1024-aligned, no pad path).
    pred = jax.random.normal(k1, (2, 4, 16, 16), dtype=jnp.float32)
    target = jax.random.normal(k2, (2, 4, 16, 16), dtype=jnp.float32)
    loss = jax.block_until_ready(masked_mse_loss(pred, target))
    ref = _reference(pred, target)
    assert jnp.allclose(loss, ref, rtol=1e-5, atol=1e-6), (loss, ref)

    # Unaligned size -> exercises the minimal zero-pad path.
    pred_u = jax.random.normal(k3, (2, 3, 13, 17), dtype=jnp.float32)
    target_u = jax.random.normal(k4, (2, 3, 13, 17), dtype=jnp.float32)
    loss_u = jax.block_until_ready(masked_mse_loss(pred_u, target_u))
    ref_u = _reference(pred_u, target_u)
    assert jnp.allclose(loss_u, ref_u, rtol=1e-5, atol=1e-6), (loss_u, ref_u)

    # Multi-block size -> exercises the core split + tail-block masking.
    pred_l = jax.random.normal(k5, (4, 16, 100, 100), dtype=jnp.float32)
    target_l = jax.random.normal(k6, (4, 16, 100, 100), dtype=jnp.float32)
    loss_l = jax.block_until_ready(masked_mse_loss(pred_l, target_l))
    ref_l = _reference(pred_l, target_l)
    assert jnp.allclose(loss_l, ref_l, rtol=1e-5, atol=1e-6), (loss_l, ref_l)

    print("KERNEL_OK")
</pallas_src>

<mosaic_0001>
module attributes {stable_mosaic.version = 11 : i64} {
  func.func @_masked_mse_kernel(%arg0: i32, %arg1: i32, %arg2: memref<2x8x128xf32, #tpu.memory_space<vmem>>, %arg3: memref<2x8x128xf32, #tpu.memory_space<vmem>>, %arg4: memref<1x8x128xf32, #tpu.memory_space<vmem>>, %arg5: memref<1x8x128xf32, #tpu.memory_space<vmem>>) attributes {dimension_semantics = [#tpu.dimension_semantics<parallel>, #tpu.dimension_semantics<arbitrary>], iteration_bounds = array<i64: 1, 1>, scalar_prefetch = 0 : i64, scratch_operands = 0 : i64, tpu.core_type = #tpu.core_type<tc>, window_params = [{transform_indices = @transform_0, window_bounds = array<i64: 2, 8, 128>}, {transform_indices = @transform_1, window_bounds = array<i64: 2, 8, 128>}, {transform_indices = @transform_2, window_bounds = array<i64: 1, 8, 128>}, {transform_indices = @transform_3, window_bounds = array<i64: 1, 8, 128>}]} {
    %c0_i32 = arith.constant 0 : i32
    %0 = arith.cmpi eq, %arg1, %c0_i32 : i32
    %1 = arith.extui %0 : i1 to i32
    %c0_i32_0 = arith.constant 0 : i32
    %2 = arith.cmpi ne, %1, %c0_i32_0 : i32
    scf.if %2 {
      %cst_22 = arith.constant 0.000000e+00 : f32
      %36 = vector.broadcast %cst_22 : f32 to vector<8x128xf32>
      %c0_23 = arith.constant 0 : index
      %c0_24 = arith.constant 0 : index
      %c0_25 = arith.constant 0 : index
      %37 = vector.load %arg4[%c0_23, %c0_24, %c0_25] : memref<1x8x128xf32, #tpu.memory_space<vmem>>, vector<1x8x128xf32>
      %38 = vector.shape_cast %37 : vector<1x8x128xf32> to vector<8x128xf32>
      %39 = vector.shape_cast %36 : vector<8x128xf32> to vector<1x8x128xf32>
      tpu.vector_store %arg4[%c0_23, %c0_24, %c0_25], %39 {strides = array<i32>} : memref<1x8x128xf32, #tpu.memory_space<vmem>>, vector<1x8x128xf32>,
      %cst_26 = arith.constant 0.000000e+00 : f32
      %40 = vector.broadcast %cst_26 : f32 to vector<8x128xf32>
      %c0_27 = arith.constant 0 : index
      %c0_28 = arith.constant 0 : index
      %c0_29 = arith.constant 0 : index
      %41 = vector.load %arg5[%c0_27, %c0_28, %c0_29] : memref<1x8x128xf32, #tpu.memory_space<vmem>>, vector<1x8x128xf32>
      %42 = vector.shape_cast %41 : vector<1x8x128xf32> to vector<8x128xf32>
      %43 = vector.shape_cast %40 : vector<8x128xf32> to vector<1x8x128xf32>
      tpu.vector_store %arg5[%c0_27, %c0_28, %c0_29], %43 {strides = array<i32>} : memref<1x8x128xf32, #tpu.memory_space<vmem>>, vector<1x8x128xf32>,
    } else {
    }
    %c1_i32 = arith.constant 1 : i32
    %3 = arith.muli %arg0, %c1_i32 : i32
    %4 = arith.addi %3, %arg1 : i32
    %c2_i32 = arith.constant 2 : i32
    %5 = arith.muli %4, %c2_i32 : i32
    %6 = tpu.iota {dimensions = array<i32: 0>} : vector<2x8x128xi32>
    %7 = vector.broadcast %5 : i32 to vector<2x8x128xi32>
    %8 = arith.addi %7, %6 : vector<2x8x128xi32>
    %c2_i32_1 = arith.constant 2 : i32
    %9 = vector.broadcast %c2_i32_1 : i32 to vector<2x8x128xi32>
    %10 = arith.cmpi slt, %8, %9 : vector<2x8x128xi32>
    %c0 = arith.constant 0 : index
    %c0_2 = arith.constant 0 : index
    %c0_3 = arith.constant 0 : index
    %11 = vector.load %arg3[%c0, %c0_2, %c0_3] : memref<2x8x128xf32, #tpu.memory_space<vmem>>, vector<2x8x128xf32>
    %c0_4 = arith.constant 0 : index
    %c0_5 = arith.constant 0 : index
    %c0_6 = arith.constant 0 : index
    %12 = vector.load %arg2[%c0_4, %c0_5, %c0_6] : memref<2x8x128xf32, #tpu.memory_space<vmem>>, vector<2x8x128xf32>
    %cst = arith.constant 0.000000e+00 : f32
    %13 = vector.broadcast %cst : f32 to vector<2x8x128xf32>
    %14 = arith.cmpf ogt, %11, %13 : vector<2x8x128xf32>
    %15 = arith.andi %14, %10 : vector<2x8x128xi1>
    %16 = arith.subf %11, %12 : vector<2x8x128xf32>
    %cst_7 = arith.constant 0.000000e+00 : f32
    %17 = vector.broadcast %cst_7 : f32 to vector<2x8x128xf32>
    %18 = arith.select %15, %16, %17 : vector<2x8x128xi1>, vector<2x8x128xf32>
    %c0_8 = arith.constant 0 : index
    %c0_9 = arith.constant 0 : index
    %c0_10 = arith.constant 0 : index
    %19 = vector.load %arg4[%c0_8, %c0_9, %c0_10] : memref<1x8x128xf32, #tpu.memory_space<vmem>>, vector<1x8x128xf32>
    %20 = vector.shape_cast %19 : vector<1x8x128xf32> to vector<8x128xf32>
    %21 = arith.mulf %18, %18 : vector<2x8x128xf32>
    %cst_11 = arith.constant dense<0.000000e+00> : vector<8x128xf32>
    %22 = vector.multi_reduction <add>, %21, %cst_11 [0] : vector<2x8x128xf32> to vector<8x128xf32>
    %23 = arith.addf %20, %22 : vector<8x128xf32>
    %c0_12 = arith.constant 0 : index
    %c0_13 = arith.constant 0 : index
    %c0_14 = arith.constant 0 : index
    %24 = vector.load %arg4[%c0_12, %c0_13, %c0_14] : memref<1x8x128xf32, #tpu.memory_space<vmem>>, vector<1x8x128xf32>
    %25 = vector.shape_cast %24 : vector<1x8x128xf32> to vector<8x128xf32>
    %26 = vector.shape_cast %23 : vector<8x128xf32> to vector<1x8x128xf32>
    tpu.vector_store %arg4[%c0_12, %c0_13, %c0_14], %26 {strides = array<i32>} : memref<1x8x128xf32, #tpu.memory_space<vmem>>, vector<1x8x128xf32>,
    %c0_15 = arith.constant 0 : index
    %c0_16 = arith.constant 0 : index
    %c0_17 = arith.constant 0 : index
    %27 = vector.load %arg5[%c0_15, %c0_16, %c0_17] : memref<1x8x128xf32, #tpu.memory_space<vmem>>, vector<1x8x128xf32>
    %28 = vector.shape_cast %27 : vector<1x8x128xf32> to vector<8x128xf32>
    %29 = arith.extui %15 : vector<2x8x128xi1> to vector<2x8x128xi32>
    %30 = arith.sitofp %29 : vector<2x8x128xi32> to vector<2x8x128xf32>
    %cst_18 = arith.constant dense<0.000000e+00> : vector<8x128xf32>
    %31 = vector.multi_reduction <add>, %30, %cst_18 [0] : vector<2x8x128xf32> to vector<8x128xf32>
    %32 = arith.addf %28, %31 : vector<8x128xf32>
    %c0_19 = arith.constant 0 : index
    %c0_20 = arith.constant 0 : index
    %c0_21 = arith.constant 0 : index
    %33 = vector.load %arg5[%c0_19, %c0_20, %c0_21] : memref<1x8x128xf32, #tpu.memory_space<vmem>>, vector<1x8x128xf32>
    %34 = vector.shape_cast %33 : vector<1x8x128xf32> to vector<8x128xf32>
    %35 = vector.shape_cast %32 : vector<8x128xf32> to vector<1x8x128xf32>
    tpu.vector_store %arg5[%c0_19, %c0_20, %c0_21], %35 {strides = array<i32>} : memref<1x8x128xf32, #tpu.memory_space<vmem>>, vector<1x8x128xf32>,
    return
  }
  func.func @transform_0(%arg0: i32, %arg1: i32) -> (i32, i32, i32) {
    %c1_i32 = arith.constant 1 : i32
    %0 = arith.muli %arg0, %c1_i32 : i32
    %1 = arith.addi %0, %arg1 : i32
    %c0_i32 = arith.constant 0 : i32
    %2 = arith.minsi %1, %c0_i32 : i32
    %c0_i32_0 = arith.constant 0 : i32
    %c0_i32_1 = arith.constant 0 : i32
    %c0_i32_2 = arith.constant 0 : i32
    return %2, %c0_i32_0, %c0_i32_1 : i32, i32, i32
  }
  func.func @transform_1(%arg0: i32, %arg1: i32) -> (i32, i32, i32) {
    %c1_i32 = arith.constant 1 : i32
    %0 = arith.muli %arg0, %c1_i32 : i32
    %1 = arith.addi %0, %arg1 : i32
    %c0_i32 = arith.constant 0 : i32
    %2 = arith.minsi %1, %c0_i32 : i32
    %c0_i32_0 = arith.constant 0 : i32
    %c0_i32_1 = arith.constant 0 : i32
    %c0_i32_2 = arith.constant 0 : i32
    return %2, %c0_i32_0, %c0_i32_1 : i32, i32, i32
  }
  func.func @transform_2(%arg0: i32, %arg1: i32) -> (i32, i32, i32) {
    %c0_i32 = arith.constant 0 : i32
    %c0_i32_0 = arith.constant 0 : i32
    %c0_i32_1 = arith.constant 0 : i32
    return %arg0, %c0_i32, %c0_i32_0 : i32, i32, i32
  }
  func.func @transform_3(%arg0: i32, %arg1: i32) -> (i32, i32, i32) {
    %c0_i32 = arith.constant 0 : i32
    %c0_i32_0 = arith.constant 0 : i32
    %c0_i32_1 = arith.constant 0 : i32
    return %arg0, %c0_i32, %c0_i32_0 : i32, i32, i32
  }
}

</mosaic_0001>

<llo_original>
// kernel: tpu_custom_call.1
$region0: #{tpu_custom_call.1}
  #allocation0 [shape = 'u32[]', space=smem, size = 0x4, offset = 0x4, fixed_abs, tag = 'smem constant byte address 0x4 - core index']
  #allocation1 [shape = 'u32[144,128]{1,0:T(1,128)}', space=vmem, size = 0x12000, scoped, tag = 'internal scratch']
  %s0 = inlined_call_operand.hbm [shape: f32[2,8,128], index: 0, kind: input, shape index: {}]
  %s1 = inlined_call_operand.hbm [shape: f32[2,8,128], index: 1, kind: input, shape index: {}]
  %s2 = inlined_call_operand.hbm [shape: f32[1,8,128], index: 2, kind: output, shape index: {0}]
  %s3 = inlined_call_operand.hbm [shape: f32[1,8,128], index: 3, kind: output, shape index: {1}]
  %4 = xla_tuple %s2, %s3
  %s5 = sld [smem:[#allocation0]]
  $region38: #{tpu_custom_call.1} parent=0
    _
  %s7 = ssub.s32 1, %s5
  %s8 = scalar_select 0, %s7, %s5
  $region1: #{tpu_custom_call.1} parent=0
    #allocation2 [shape = 'u8[8192]{0}', space=vmem, size = 0x2000, scoped, tag = 'input window, operand 0, single buffered']
    #allocation3 [shape = 's32[1]{0}', space=sflag, size = 0x4, scoped, tag = 'scoped memory for tpu_custom_call.1']
    #allocation4 [shape = 's32[1]{0}', space=sflag, size = 0x4, scoped, tag = 'scoped memory for tpu_custom_call.1']
    #allocation5 [shape = 'u8[8192]{0}', space=vmem, size = 0x2000, scoped, tag = 'input window, operand 1, single buffered']
    #allocation6 [shape = 's32[1]{0}', space=sflag, size = 0x4, scoped, tag = 'scoped memory for tpu_custom_call.1']
    #allocation7 [shape = 'u8[4096]{0}', space=vmem, size = 0x1000, scoped, tag = 'output window, operand 0, single buffered']
    #allocation8 [shape = 'u8[4096]{0}', space=vmem, size = 0x1000, scoped, tag = 'output window, operand 1, single buffered']
    #allocation9 [shape = 's32[1]{0}', space=sflag, size = 0x4, scoped, tag = 'scoped memory for tpu_custom_call.1']
    %9 = vsyncpa [#allocation3], 0
    %10 = vsyncpa [#allocation6], 0
    %11 = vsyncpa [#allocation4], 0
    %12 = vsyncpa [#allocation9], 0
    // Predicated region
    $region2: #{tpu_custom_call.1} parent=1 // pred_check
      _
    $region3: #{tpu_custom_call.1} parent=1 // pred_check_branch
      %14 = sbr.rel (0) target = $region5
    $region4: #{tpu_custom_call.1} parent=1 // pred_region
      %s15 = sadd.s32 0, 0
      %p16 = scmp.lt.s32.totalorder %s15, 0
      %s17 = scalar_select %p16, %s15, 0
      %s18 = smul.u32 2, %s17
      %s20 = ssub.s32 256, 256
      %21 = vsyncadd [#allocation3], %s20
      %s22 = smul.addr %s18, 128
      %s23 = scalar_lea.hbm %s0, %s22
      %s24 = sshll.u32 [#allocation2], 4
      %s25 = int_to_ptr.vmem [resolvable:$true] %s24
      %30 = dma.hbm_to_vmem [thread:$0]  %s23, 256, %s25, [#allocation3], 128, 128, 8
    $region5: #{tpu_custom_call.1} parent=1 // pred_fallthru
      _
    // Predicated region
    $region6: #{tpu_custom_call.1} parent=1 // pred_check
      _
    $region7: #{tpu_custom_call.1} parent=1 // pred_check_branch
      %32 = sbr.rel (0) target = $region9
    $region8: #{tpu_custom_call.1} parent=1 // pred_region
      %s33 = sadd.s32 0, 0
      %p34 = scmp.lt.s32.totalorder %s33, 0
      %s35 = scalar_select %p34, %s33, 0
      %s36 = smul.u32 2, %s35
      %s38 = ssub.s32 256, 256
      %39 = vsyncadd [#allocation6], %s38
      %s40 = smul.addr %s36, 128
      %s41 = scalar_lea.hbm %s1, %s40
      %s42 = sshll.u32 [#allocation5], 4
      %s43 = int_to_ptr.vmem [resolvable:$true] %s42
      %48 = dma.hbm_to_vmem [thread:$0]  %s41, 256, %s43, [#allocation6], 128, 128, 8
    $region9: #{tpu_custom_call.1} parent=1 // pred_fallthru
      _
    // Predicated region
    $region10: #{tpu_custom_call.1} parent=1 // pred_check
      _
    $region11: #{tpu_custom_call.1} parent=1 // pred_check_branch
      %50 = sbr.rel (0) target = $region13
    $region12: #{tpu_custom_call.1} parent=1 // pred_region
      %51 = dma.done [#allocation3], 256
    $region13: #{tpu_custom_call.1} parent=1 // pred_fallthru
      _
    // Predicated region
    $region14: #{tpu_custom_call.1} parent=1 // pred_check
      _
    $region15: #{tpu_custom_call.1} parent=1 // pred_check_branch
      %53 = sbr.rel (0) target = $region17
    $region16: #{tpu_custom_call.1} parent=1 // pred_region
      %54 = dma.done [#allocation6], 256
    $region17: #{tpu_custom_call.1} parent=1 // pred_fallthru
      _
    %s55 = sadd.s32 0, 0
    %p56 = scmp.lt.s32.totalorder %s55, 0
    %s57 = scalar_select %p56, %s55, 0
    %s58 = smul.u32 2, %s57
    %s59 = sadd.s32 0, 0
    %p60 = scmp.lt.s32.totalorder %s59, 0
    %s61 = scalar_select %p60, %s59, 0
    %s62 = smul.u32 2, %s61
    %p63 = scmp.eq.s32.totalorder 0, 0
    // Predicated region
    $region18: #{tpu_custom_call.1} parent=1 // pred_check
      %p64 = pneg %p63
    $region19: #{tpu_custom_call.1} parent=1 // pred_check_branch
      %66 = sbr.rel (%p64) target = $region21
    $region20: #{tpu_custom_call.1} parent=1 // pred_region
      %67 = vst [vmem:[#allocation7] sm:$0xff] 0.0
      %68 = vst [vmem:[#allocation8] sm:$0xff] 0.0
    $region21: #{tpu_custom_call.1} parent=1 // pred_fallthru
      _
    %s69 = sadd.s32 0, 0
    %s70 = smul.u32 %s69, 2
    %v71 = vstv %s70
    %v72 = vadd.s32 %v71, 1
    %vm73 = vcmp.lt.s32.totalorder %v71, 2
    %vm74 = vcmp.lt.s32.totalorder %v72, 2
    %v75 = vld [vmem:[#allocation5] sm:$0xff]
    %v76 = vld [vmem:[#allocation5 + $0x8] sm:$0xff]
    %v77 = vld [vmem:[#allocation2] sm:$0xff]
    %v78 = vld [vmem:[#allocation2 + $0x8] sm:$0xff]
    %vm79 = vcmp.gt.f32.partialorder %v75, 0.0
    %vm80 = vcmp.gt.f32.partialorder %v76, 0.0
    %vm81 = vmand %vm79, %vm73
    %vm82 = vmand %vm80, %vm74
    %v83 = vsub.f32 %v75, %v77
    %v84 = vsub.f32 %v76, %v78
    %v85 = vsel %vm81, %v83, 0.0
    %v86 = vsel %vm82, %v84, 0.0
    %v87 = vld [vmem:[#allocation7] sm:$0xff]
    %v88 = vmul.f32 %v85, %v85
    %v89 = vmul.f32 %v86, %v86
    %v90 = vadd.f32 %v88, %v89
    %v91 = vadd.f32 %v87, %v90
    %92 = vst [vmem:[#allocation7] sm:$0xff] %v91
    %v93 = vld [vmem:[#allocation8] sm:$0xff]
    %v94 = vsel %vm81, 1, 0
    %v95 = vsel %vm82, 1, 0
    %v96 = vcvt.s32.f32 %v94
    %v97 = vcvt.s32.f32 %v95
    %v98 = vadd.f32 %v96, %v97
    %v99 = vadd.f32 %v93, %v98
    %100 = vst [vmem:[#allocation8] sm:$0xff] %v99
    // Predicated region
    $region22: #{tpu_custom_call.1} parent=1 // pred_check
      _
    $region23: #{tpu_custom_call.1} parent=1 // pred_check_branch
      %102 = sbr.rel (0) target = $region25
    $region24: #{tpu_custom_call.1} parent=1 // pred_region
      %s104 = ssub.s32 128, 128
      %105 = vsyncadd [#allocation4], %s104
      %s107 = sshll.u32 [#allocation7], 4
      %s108 = int_to_ptr.vmem [resolvable:$true] %s107
      %110 = dma.vmem_to_hbm [thread:$0]  %s108, 128, %s2, [#allocation4]
    $region25: #{tpu_custom_call.1} parent=1 // pred_fallthru
      _
    // Predicated region
    $region26: #{tpu_custom_call.1} parent=1 // pred_check
      _
    $region27: #{tpu_custom_call.1} parent=1 // pred_check_branch
      %112 = sbr.rel (0) target = $region29
    $region28: #{tpu_custom_call.1} parent=1 // pred_region
      %s114 = ssub.s32 128, 128
      %115 = vsyncadd [#allocation9], %s114
      %s117 = sshll.u32 [#allocation8], 4
      %s118 = int_to_ptr.vmem [resolvable:$true] %s117
      %120 = dma.vmem_to_hbm [thread:$0]  %s118, 128, %s3, [#allocation9]
    $region29: #{tpu_custom_call.1} parent=1 // pred_fallthru
      _
    // Predicated region
    $region30: #{tpu_custom_call.1} parent=1 // pred_check
      _
    $region31: #{tpu_custom_call.1} parent=1 // pred_check_branch
      %122 = sbr.rel (0) target = $region33
    $region32: #{tpu_custom_call.1} parent=1 // pred_region
      %123 = dma.done [#allocation4], 128
    $region33: #{tpu_custom_call.1} parent=1 // pred_fallthru
      _
    // Predicated region
    $region34: #{tpu_custom_call.1} parent=1 // pred_check
      _
    $region35: #{tpu_custom_call.1} parent=1 // pred_check_branch
      %125 = sbr.rel (0) target = $region37
    $region36: #{tpu_custom_call.1} parent=1 // pred_region
      %126 = dma.done [#allocation9], 128
    $region37: #{tpu_custom_call.1} parent=1 // pred_fallthru
      _
    %127 = vsyncpa [#allocation3], 1
    %128 = vsyncpa [#allocation6], 1
    %129 = vsyncpa [#allocation4], 1
    %130 = vsyncpa [#allocation9], 1

</llo_original>
